<compile_context>
chip_gen: v5e
topology: v5e:2x2
jax: 0.10.0
libtpu: 0.0.40
codegen_flags: <defaults>
</compile_context>

<pallas_src>
import jax
import jax.numpy as jnp
from jax.experimental import pallas as pl
from jax.experimental.pallas import tpu as pltpu


def _round_up(x, m):
    return ((x + m - 1) // m) * m


def critic_ppo2_kernel(x_ref, w1_ref, b1_ref, w2_ref, b2_ref, o_ref):
    # fc1: bf16 MXU inputs (state cast in-kernel, weights pre-cast), f32 accumulation.
    h = jnp.dot(x_ref[...].astype(jnp.bfloat16), w1_ref[...],
                preferred_element_type=jnp.float32)
    # Bias + ReLU in f32 on the VPU.
    h = jnp.maximum(h + b1_ref[...], 0.0)
    # fc2 (value head, out_dim == 1): f32 elementwise multiply (VPU) + lane
    # reduction (XLU) -> (tb, 1). No output padding, no MXU needed for a width-1 head.
    v = jnp.sum(h * w2_ref[...], axis=-1, keepdims=True) + b2_ref[...]
    o_ref[...] = v.astype(o_ref.dtype)


def prepare_params(w1, b1, w2, b2):
    """One-time parameter preprocessing, hoisted out of the per-call forward path.

    w1: (S, H), b1: (H,) or (1, H), w2: (H, 1) or (H,), b2: scalar / (1,) / (1, 1).
    Returns (w1_bf16, b1_row_f32, w2_row_f32, b2_f32) ready for the kernel.
    """
    w1_bf = jnp.asarray(w1).astype(jnp.bfloat16)                 # bf16 MXU weights
    b1_row = jnp.asarray(b1, jnp.float32).reshape(1, -1)          # (1, H)
    w2_row = jnp.asarray(w2, jnp.float32).reshape(1, -1)          # (1, H) row for reduction head
    b2_sc = jnp.asarray(b2, jnp.float32).reshape(1, 1)            # (1, 1)
    return w1_bf, b1_row, w2_row, b2_sc


def critic_ppo2_forward(state, w1_bf, b1, w2_row, b2, *, block_b=1024):
    """state: (B, S) f32 or bf16; prepared params from prepare_params().
    Returns (B, 1) f32 values."""
    B, S = state.shape
    H = w1_bf.shape[1]

    # Tile choice: one grid step for small batches (removes per-step overhead);
    # large batch tiles otherwise (mem-bound kernel -> bigger tiles hit HBM roofline,
    # and the "parallel" batch axis shards steps across v7x's 2 TensorCores).
    if B <= block_b:
        tb = _round_up(B, 8)
        Bp = tb
    else:
        tb = block_b
        Bp = _round_up(B, tb)
    if Bp != B:
        state = jnp.pad(state, ((0, Bp - B), (0, 0)))

    in_bytes = Bp * S * state.dtype.itemsize
    w_bytes = (w1_bf.size * 2) + (b1.size + w2_row.size + b2.size) * 4
    out_bytes = Bp * 4
    cost = pl.CostEstimate(
        flops=2 * Bp * S * H + 2 * Bp * H,
        transcendentals=0,
        bytes_accessed=in_bytes + w_bytes + out_bytes,
    )

    out = pl.pallas_call(
        critic_ppo2_kernel,
        out_shape=jax.ShapeDtypeStruct((Bp, 1), jnp.float32),
        grid=(Bp // tb,),
        in_specs=[
            pl.BlockSpec((tb, S), lambda i: (i, 0)),     # streamed state tile
            pl.BlockSpec((S, H), lambda i: (0, 0)),      # resident fc1 weights
            pl.BlockSpec((1, H), lambda i: (0, 0)),      # fc1 bias
            pl.BlockSpec((1, H), lambda i: (0, 0)),      # fc2 weight row
            pl.BlockSpec((1, 1), lambda i: (0, 0)),      # fc2 bias
        ],
        out_specs=pl.BlockSpec((tb, 1), lambda i: (i, 0)),
        compiler_params=pltpu.CompilerParams(
            dimension_semantics=("parallel",)),
        cost_estimate=cost,
    )(state, w1_bf, b1, w2_row, b2)

    # Only batch padding (if any) to drop; output is already (Bp, 1).
    return out[:B] if Bp != B else out


def init_params(key, state_dim, hidden_dim):
    """Deterministic init mimicking PyTorch nn.Linear defaults
    (uniform in [-1/sqrt(fan_in), 1/sqrt(fan_in)]), stored as (in, out)."""
    k1, k2, k3, k4 = jax.random.split(key, 4)
    bound1 = 1.0 / (state_dim ** 0.5)
    bound2 = 1.0 / (hidden_dim ** 0.5)
    w1 = jax.random.uniform(k1, (state_dim, hidden_dim), jnp.float32, -bound1, bound1)
    b1 = jax.random.uniform(k2, (1, hidden_dim), jnp.float32, -bound1, bound1)
    w2 = jax.random.uniform(k3, (hidden_dim, 1), jnp.float32, -bound2, bound2)
    b2 = jax.random.uniform(k4, (1, 1), jnp.float32, -bound2, bound2)
    return w1, b1, w2, b2


if __name__ == "__main__":
    batch = 200          # deliberately not a multiple of 8 (exercises batch padding)
    state_dim = 32
    hidden_dim = 256

    key = jax.random.PRNGKey(0)
    pkey, xkey = jax.random.split(key)
    w1, b1, w2, b2 = init_params(pkey, state_dim, hidden_dim)
    state = jax.random.normal(xkey, (batch, state_dim), jnp.float32)

    # Parameter prep happens ONCE, outside the forward path.
    w1_bf, b1_row, w2_row, b2_sc = prepare_params(w1, b1, w2, b2)

    out = critic_ppo2_forward(state, w1_bf, b1_row, w2_row, b2_sc)
    out = jax.block_until_ready(out)

    # Pure-JAX f32 reference; tolerance loosened only for the bf16 fc1 MXU inputs
    # (fc2 is computed fully in f32 in the kernel).
    h_ref = jnp.maximum(state @ w1 + b1, 0.0)
    ref = h_ref @ w2 + b2
    assert out.shape == (batch, 1)
    assert jnp.allclose(out, ref, atol=2e-2, rtol=2e-2), float(jnp.max(jnp.abs(out - ref)))

    print("KERNEL_OK")
</pallas_src>

<mosaic_0001>
module attributes {stable_mosaic.version = 11 : i64} {
  func.func @critic_ppo2_kernel(%arg0: i32, %arg1: memref<200x32xf32, #tpu.memory_space<vmem>>, %arg2: memref<32x256xbf16, #tpu.memory_space<vmem>>, %arg3: memref<1x256xf32, #tpu.memory_space<vmem>>, %arg4: memref<1x256xf32, #tpu.memory_space<vmem>>, %arg5: memref<1x1xf32, #tpu.memory_space<vmem>>, %arg6: memref<200x1xf32, #tpu.memory_space<vmem>>) attributes {dimension_semantics = [#tpu.dimension_semantics<parallel>], iteration_bounds = array<i64: 1>, scalar_prefetch = 0 : i64, scratch_operands = 0 : i64, tpu.core_type = #tpu.core_type<tc>, window_params = [{transform_indices = @transform_0, window_bounds = array<i64: 200, 32>}, {pipeline_mode = #tpu.pipeline_mode<synchronous>, transform_indices = @transform_1, window_bounds = array<i64: 32, 256>}, {pipeline_mode = #tpu.pipeline_mode<synchronous>, transform_indices = @transform_2, window_bounds = array<i64: 1, 256>}, {pipeline_mode = #tpu.pipeline_mode<synchronous>, transform_indices = @transform_3, window_bounds = array<i64: 1, 256>}, {pipeline_mode = #tpu.pipeline_mode<synchronous>, transform_indices = @transform_4, window_bounds = array<i64: 1, 1>}, {transform_indices = @transform_5, window_bounds = array<i64: 200, 1>}]} {
    %c0 = arith.constant 0 : index
    %c0_0 = arith.constant 0 : index
    %0 = vector.load %arg1[%c0, %c0_0] : memref<200x32xf32, #tpu.memory_space<vmem>>, vector<200x32xf32>
    %1 = arith.truncf %0 : vector<200x32xf32> to vector<200x32xbf16>
    %c0_1 = arith.constant 0 : index
    %c0_2 = arith.constant 0 : index
    %2 = vector.load %arg2[%c0_1, %c0_2] : memref<32x256xbf16, #tpu.memory_space<vmem>>, vector<32x256xbf16>
    %cst = arith.constant dense<0.000000e+00> : vector<200x256xf32>
    %3 = tpu.matmul %1, %2, %cst {dimension_numbers = #tpu.dot_dimension_numbers<[1], [0], [0], [1], [0, 0, 1, 1], [], []>} : vector<200x32xbf16>, vector<32x256xbf16>, vector<200x256xf32> -> vector<200x256xf32>
    %c0_3 = arith.constant 0 : index
    %c0_4 = arith.constant 0 : index
    %4 = vector.load %arg3[%c0_3, %c0_4] : memref<1x256xf32, #tpu.memory_space<vmem>>, vector<1x256xf32>
    %5 = vector.broadcast %4 : vector<1x256xf32> to vector<200x256xf32>
    %6 = arith.addf %3, %5 : vector<200x256xf32>
    %cst_5 = arith.constant 0.000000e+00 : f32
    %7 = vector.broadcast %cst_5 : f32 to vector<200x256xf32>
    %8 = arith.maximumf %6, %7 : vector<200x256xf32>
    %c0_6 = arith.constant 0 : index
    %c0_7 = arith.constant 0 : index
    %9 = vector.load %arg4[%c0_6, %c0_7] : memref<1x256xf32, #tpu.memory_space<vmem>>, vector<1x256xf32>
    %10 = vector.broadcast %9 : vector<1x256xf32> to vector<200x256xf32>
    %11 = arith.mulf %8, %10 : vector<200x256xf32>
    %cst_8 = arith.constant dense<0.000000e+00> : vector<200xf32>
    %12 = vector.multi_reduction <add>, %11, %cst_8 [1] : vector<200x256xf32> to vector<200xf32>
    %13 = vector.shape_cast %12 : vector<200xf32> to vector<200x1xf32>
    %c0_9 = arith.constant 0 : index
    %c0_10 = arith.constant 0 : index
    %14 = vector.load %arg5[%c0_9, %c0_10] : memref<1x1xf32, #tpu.memory_space<vmem>>, vector<1x1xf32>
    %15 = vector.broadcast %14 : vector<1x1xf32> to vector<200x1xf32>
    %16 = arith.addf %13, %15 : vector<200x1xf32>
    %c0_11 = arith.constant 0 : index
    %c0_12 = arith.constant 0 : index
    %17 = vector.load %arg6[%c0_11, %c0_12] : memref<200x1xf32, #tpu.memory_space<vmem>>, vector<200x1xf32>
    tpu.vector_store %arg6[%c0_11, %c0_12], %16 {strides = array<i32>} : memref<200x1xf32, #tpu.memory_space<vmem>>, vector<200x1xf32>,
    return
  }
  func.func @transform_0(%arg0: i32) -> (i32, i32) {
    %c0_i32 = arith.constant 0 : i32
    %c0_i32_0 = arith.constant 0 : i32
    return %arg0, %c0_i32 : i32, i32
  }
  func.func @transform_1(%arg0: i32) -> (i32, i32) {
    %c0_i32 = arith.constant 0 : i32
    %c0_i32_0 = arith.constant 0 : i32
    %c0_i32_1 = arith.constant 0 : i32
    return %c0_i32, %c0_i32_0 : i32, i32
  }
  func.func @transform_2(%arg0: i32) -> (i32, i32) {
    %c0_i32 = arith.constant 0 : i32
    %c0_i32_0 = arith.constant 0 : i32
    %c0_i32_1 = arith.constant 0 : i32
    return %c0_i32, %c0_i32_0 : i32, i32
  }
  func.func @transform_3(%arg0: i32) -> (i32, i32) {
    %c0_i32 = arith.constant 0 : i32
    %c0_i32_0 = arith.constant 0 : i32
    %c0_i32_1 = arith.constant 0 : i32
    return %c0_i32, %c0_i32_0 : i32, i32
  }
  func.func @transform_4(%arg0: i32) -> (i32, i32) {
    %c0_i32 = arith.constant 0 : i32
    %c0_i32_0 = arith.constant 0 : i32
    %c0_i32_1 = arith.constant 0 : i32
    return %c0_i32, %c0_i32_0 : i32, i32
  }
  func.func @transform_5(%arg0: i32) -> (i32, i32) {
    %c0_i32 = arith.constant 0 : i32
    %c0_i32_0 = arith.constant 0 : i32
    return %arg0, %c0_i32 : i32, i32
  }
}

</mosaic_0001>

<llo_original>
// kernel: tpu_custom_call.1
$region0: #{tpu_custom_call.1}
  #allocation0 [shape = 'u32[]', space=smem, size = 0x4, offset = 0x4, fixed_abs, tag = 'smem constant byte address 0x4 - core index']
  #allocation1 [shape = 'u32[72,128]{1,0:T(1,128)}', space=vmem, size = 0x9000, scoped, tag = 'internal scratch']
  #allocation2 [shape = 'f32[1,1]{1,0:T(1,128)S(1)}', space=vmem, size = 0x200, scoped, tag = 'scoped memory for tpu_custom_call.1']
  %s0 = inlined_call_operand.vmem [shape: f32[200,32], index: 0, kind: input, shape index: {}]
  %s1 = inlined_call_operand.vmem [shape: bf16[32,256], index: 1, kind: input, shape index: {}]
  %s2 = inlined_call_operand.vmem [shape: f32[1,256], index: 2, kind: input, shape index: {}]
  %s3 = inlined_call_operand.vmem [shape: f32[1,256], index: 3, kind: input, shape index: {}]
  %s4 = inlined_call_operand.<no memory space> [shape: f32[1,1], index: 4, kind: input, shape index: {}]
  %s5 = inlined_call_operand.vmem [shape: f32[200,1], index: 5, kind: output, shape index: {}]
  %s6 = sld [smem:[#allocation0]]
  $region30: #{tpu_custom_call.1} parent=0
    _
  %s8 = ssub.s32 1, %s6
  %s9 = scalar_select 0, %s8, %s6
  %v10 = vstv %s4
  %11 = vst [vmem:[#allocation2] sm:$0x1] %v10
  // Predicated region
  $region2: #{tpu_custom_call.1} parent=0 // pred_check
    _
  $region3: #{tpu_custom_call.1} parent=0 // pred_check_branch
    %13 = sbr.rel (0) target = $region5
  $region4: #{tpu_custom_call.1} parent=0 // pred_region
    _
  $region5: #{tpu_custom_call.1} parent=0 // pred_fallthru
    _
  // Predicated region
  $region6: #{tpu_custom_call.1} parent=0 // pred_check
    _
  $region7: #{tpu_custom_call.1} parent=0 // pred_check_branch
    %15 = sbr.rel (0) target = $region9
  $region8: #{tpu_custom_call.1} parent=0 // pred_region
    _
  $region9: #{tpu_custom_call.1} parent=0 // pred_fallthru
    _
  // Predicated region
  $region10: #{tpu_custom_call.1} parent=0 // pred_check
    _
  $region11: #{tpu_custom_call.1} parent=0 // pred_check_branch
    %17 = sbr.rel (0) target = $region13
  $region12: #{tpu_custom_call.1} parent=0 // pred_region
    _
  $region13: #{tpu_custom_call.1} parent=0 // pred_fallthru
    _
  // Predicated region
  $region14: #{tpu_custom_call.1} parent=0 // pred_check
    _
  $region15: #{tpu_custom_call.1} parent=0 // pred_check_branch
    %19 = sbr.rel (0) target = $region17
  $region16: #{tpu_custom_call.1} parent=0 // pred_region
    _
  $region17: #{tpu_custom_call.1} parent=0 // pred_fallthru
    _
  // Predicated region
  $region18: #{tpu_custom_call.1} parent=0 // pred_check
    _
  $region19: #{tpu_custom_call.1} parent=0 // pred_check_branch
    %21 = sbr.rel (0) target = $region21
  $region20: #{tpu_custom_call.1} parent=0 // pred_region
    _
  $region21: #{tpu_custom_call.1} parent=0 // pred_fallthru
    _
  %v23 = vld [vmem:[%s0] sm:$0xff]
  %v24 = vld [vmem:[%s0 + $0x8] sm:$0xff]
  %v25 = vld [vmem:[%s0 + $0x10] sm:$0xff]
  %v26 = vld [vmem:[%s0 + $0x18] sm:$0xff]
  %v27 = vld [vmem:[%s0 + $0x20] sm:$0xff]
  %v28 = vld [vmem:[%s0 + $0x28] sm:$0xff]
  %v29 = vld [vmem:[%s0 + $0x30] sm:$0xff]
  %v30 = vld [vmem:[%s0 + $0x38] sm:$0xff]
  %v31 = vld [vmem:[%s0 + $0x40] sm:$0xff]
  %v32 = vld [vmem:[%s0 + $0x48] sm:$0xff]
  %v33 = vld [vmem:[%s0 + $0x50] sm:$0xff]
  %v34 = vld [vmem:[%s0 + $0x58] sm:$0xff]
  %v35 = vld [vmem:[%s0 + $0x60] sm:$0xff]
  %v36 = vld [vmem:[%s0 + $0x68] sm:$0xff]
  %v37 = vld [vmem:[%s0 + $0x70] sm:$0xff]
  %v38 = vld [vmem:[%s0 + $0x78] sm:$0xff]
  %v39 = vld [vmem:[%s0 + $0x80] sm:$0xff]
  %v40 = vld [vmem:[%s0 + $0x88] sm:$0xff]
  %v41 = vld [vmem:[%s0 + $0x90] sm:$0xff]
  %v42 = vld [vmem:[%s0 + $0x98] sm:$0xff]
  %v43 = vld [vmem:[%s0 + $0xa0] sm:$0xff]
  %v44 = vld [vmem:[%s0 + $0xa8] sm:$0xff]
  %v45 = vld [vmem:[%s0 + $0xb0] sm:$0xff]
  %v46 = vld [vmem:[%s0 + $0xb8] sm:$0xff]
  %v47 = vld [vmem:[%s0 + $0xc0] sm:$0xff]
  %v48 = vpack.c.bf16 %v24, %v23
  %v49 = vpack.c.bf16 %v26, %v25
  %v50 = vpack.c.bf16 %v28, %v27
  %v51 = vpack.c.bf16 %v30, %v29
  %v52 = vpack.c.bf16 %v32, %v31
  %v53 = vpack.c.bf16 %v34, %v33
  %v54 = vpack.c.bf16 %v36, %v35
  %v55 = vpack.c.bf16 %v38, %v37
  %v56 = vpack.c.bf16 %v40, %v39
  %v57 = vpack.c.bf16 %v42, %v41
  %v58 = vpack.c.bf16 %v44, %v43
  %v59 = vpack.c.bf16 %v46, %v45
  %v60 = vpack.c.bf16 %v47, %v47
  %v61 = vld [vmem:[%s1] sm:$0xff]
  %v62 = vld [vmem:[%s1 + $0x8] sm:$0xff]
  %v63 = vld [vmem:[%s1 + $0x10] sm:$0xff]
  %v64 = vld [vmem:[%s1 + $0x18] sm:$0xff]
  %v65 = vld [vmem:[%s2] sm:$0x3]
  %v67 = vperm.slane %v65, 0
  %v68 = vperm.slane %v65, 1
  %v75 = vunpack.c.l.b16 %v61
  %v76 = vunpack.c.h.b16 %v61
  %v77 = vunpack.c.l.b16 %v62
  %v78 = vunpack.c.h.b16 %v62
  %v79 = vunpack.c.l.b16 %v63
  %v80 = vunpack.c.h.b16 %v63
  %v81 = vunpack.c.l.b16 %v64
  %v82 = vunpack.c.h.b16 %v64
  %v83 = vpack.c.b16 %v77, %v75
  %v84 = vpack.c.b16 %v78, %v76
  %v85 = vpack.c.b16 %v81, %v79
  %v86 = vpack.c.b16 %v82, %v80
  %vm91 = vcmask 261120
  %v93 = vsel %vm91, %v48, 0
  %v96 = vsel %vm91, %v49, 0
  %v99 = vsel %vm91, %v50, 0
  %v102 = vsel %vm91, %v51, 0
  %v105 = vsel %vm91, %v52, 0
  %v108 = vsel %vm91, %v53, 0
  %v111 = vsel %vm91, %v54, 0
  %v114 = vsel %vm91, %v55, 0
  %v117 = vsel %vm91, %v56, 0
  %v120 = vsel %vm91, %v57, 0
  %v123 = vsel %vm91, %v58, 0
  %v126 = vsel %vm91, %v59, 0
  %v129 = vsel %vm91, %v60, 0
  %131 = vmatpush.bf16.msra.mxu0 0
  %132 = vmatpush.bf16.msra.mxu0 0
  %133 = vmatpush.bf16.msra.mxu0 0
  %134 = vmatpush.bf16.msra.mxu0 0
  %135 = vmatpush.bf16.msra.mxu0 0
  %136 = vmatpush.bf16.msra.mxu0 0
  %137 = vmatpush.bf16.msra.mxu0 %v85
  %138 = vmatpush.bf16.msra.mxu0 %v83
  %139 = vmatmul.bf16.gmra.mxu0 %v93
  %v140 = vpop.f32.mrf.mxu0
  %v141 = vadd.f32 %v67, %v140
  %v142 = vpop.f32.mrf.mxu0
  %v143 = vadd.f32 %v67, %v142
  %144 = vmatmul.bf16.gmra.mxu0 %v96
  %v145 = vpop.f32.mrf.mxu0
  %v146 = vadd.f32 %v67, %v145
  %v147 = vpop.f32.mrf.mxu0
  %v148 = vadd.f32 %v67, %v147
  %149 = vmatmul.bf16.gmra.mxu0 %v99
  %v150 = vpop.f32.mrf.mxu0
  %v151 = vadd.f32 %v67, %v150
  %v152 = vpop.f32.mrf.mxu0
  %v153 = vadd.f32 %v67, %v152
  %154 = vmatmul.bf16.gmra.mxu0 %v102
  %v155 = vpop.f32.mrf.mxu0
  %v156 = vadd.f32 %v67, %v155
  %v157 = vpop.f32.mrf.mxu0
  %v158 = vadd.f32 %v67, %v157
  %159 = vmatmul.bf16.gmra.mxu0 %v105
  %v160 = vpop.f32.mrf.mxu0
  %v161 = vadd.f32 %v67, %v160
  %v162 = vpop.f32.mrf.mxu0
  %v163 = vadd.f32 %v67, %v162
  %164 = vmatmul.bf16.gmra.mxu0 %v108
  %v165 = vpop.f32.mrf.mxu0
  %v166 = vadd.f32 %v67, %v165
  %v167 = vpop.f32.mrf.mxu0
  %v168 = vadd.f32 %v67, %v167
  %169 = vmatmul.bf16.gmra.mxu0 %v111
  %v170 = vpop.f32.mrf.mxu0
  %v171 = vadd.f32 %v67, %v170
  %v172 = vpop.f32.mrf.mxu0
  %v173 = vadd.f32 %v67, %v172
  %174 = vmatmul.bf16.gmra.mxu0 %v114
  %v175 = vpop.f32.mrf.mxu0
  %v176 = vadd.f32 %v67, %v175
  %v177 = vpop.f32.mrf.mxu0
  %v178 = vadd.f32 %v67, %v177
  %179 = vmatmul.bf16.gmra.mxu0 %v117
  %v180 = vpop.f32.mrf.mxu0
  %v181 = vadd.f32 %v67, %v180
  %v182 = vpop.f32.mrf.mxu0
  %v183 = vadd.f32 %v67, %v182
  %184 = vmatmul.bf16.gmra.mxu0 %v120
  %v185 = vpop.f32.mrf.mxu0
  %v186 = vadd.f32 %v67, %v185
  %v187 = vpop.f32.mrf.mxu0
  %v188 = vadd.f32 %v67, %v187
  %189 = vmatmul.bf16.gmra.mxu0 %v123
  %v190 = vpop.f32.mrf.mxu0
  %v191 = vadd.f32 %v67, %v190
  %v192 = vpop.f32.mrf.mxu0
  %v193 = vadd.f32 %v67, %v192
  %194 = vmatmul.bf16.gmra.mxu0 %v126
  %v195 = vpop.f32.mrf.mxu0
  %v196 = vadd.f32 %v67, %v195
  %v197 = vpop.f32.mrf.mxu0
  %v198 = vadd.f32 %v67, %v197
  %199 = vmatmul.bf16.gmra.mxu0 %v129
  %v200 = vpop.f32.mrf.mxu0
  %v201 = vadd.f32 %v67, %v200
  %v202 = vpop.f32.mrf.mxu0
  %203 = vdwg.mxu0
  %204 = vmatpush.bf16.msra.mxu0 0
  %205 = vmatpush.bf16.msra.mxu0 0
  %206 = vmatpush.bf16.msra.mxu0 0
  %207 = vmatpush.bf16.msra.mxu0 0
  %208 = vmatpush.bf16.msra.mxu0 0
  %209 = vmatpush.bf16.msra.mxu0 0
  %210 = vmatpush.bf16.msra.mxu0 %v86
  %211 = vmatpush.bf16.msra.mxu0 %v84
  %212 = vmatmul.bf16.gmra.mxu0 %v93
  %v213 = vpop.f32.mrf.mxu0
  %v214 = vadd.f32 %v68, %v213
  %v215 = vpop.f32.mrf.mxu0
  %v216 = vadd.f32 %v68, %v215
  %217 = vmatmul.bf16.gmra.mxu0 %v96
  %v218 = vpop.f32.mrf.mxu0
  %v219 = vadd.f32 %v68, %v218
  %v220 = vpop.f32.mrf.mxu0
  %v221 = vadd.f32 %v68, %v220
  %222 = vmatmul.bf16.gmra.mxu0 %v99
  %v223 = vpop.f32.mrf.mxu0
  %v224 = vadd.f32 %v68, %v223
  %v225 = vpop.f32.mrf.mxu0
  %v226 = vadd.f32 %v68, %v225
  %227 = vmatmul.bf16.gmra.mxu0 %v102
  %v228 = vpop.f32.mrf.mxu0
  %v229 = vadd.f32 %v68, %v228
  %v230 = vpop.f32.mrf.mxu0
  %v231 = vadd.f32 %v68, %v230
  %232 = vmatmul.bf16.gmra.mxu0 %v105
  %v233 = vpop.f32.mrf.mxu0
  %v234 = vadd.f32 %v68, %v233
  %v235 = vpop.f32.mrf.mxu0
  %v236 = vadd.f32 %v68, %v235
  %237 = vmatmul.bf16.gmra.mxu0 %v108
  %v238 = vpop.f32.mrf.mxu0
  %v239 = vadd.f32 %v68, %v238
  %v240 = vpop.f32.mrf.mxu0
  %v241 = vadd.f32 %v68, %v240
  %242 = vmatmul.bf16.gmra.mxu0 %v111
  %v243 = vpop.f32.mrf.mxu0
  %v244 = vadd.f32 %v68, %v243
  %v245 = vpop.f32.mrf.mxu0
  %v246 = vadd.f32 %v68, %v245
  %247 = vmatmul.bf16.gmra.mxu0 %v114
  %v248 = vpop.f32.mrf.mxu0
  %v249 = vadd.f32 %v68, %v248
  %v250 = vpop.f32.mrf.mxu0
  %v251 = vadd.f32 %v68, %v250
  %252 = vmatmul.bf16.gmra.mxu0 %v117
  %v253 = vpop.f32.mrf.mxu0
  %v254 = vadd.f32 %v68, %v253
  %v255 = vpop.f32.mrf.mxu0
  %v256 = vadd.f32 %v68, %v255
  %257 = vmatmul.bf16.gmra.mxu0 %v120
  %v258 = vpop.f32.mrf.mxu0
  %v259 = vadd.f32 %v68, %v258
  %v260 = vpop.f32.mrf.mxu0
  %v261 = vadd.f32 %v68, %v260
  %262 = vmatmul.bf16.gmra.mxu0 %v123
  %v263 = vpop.f32.mrf.mxu0
  %v264 = vadd.f32 %v68, %v263
  %v265 = vpop.f32.mrf.mxu0
  %v266 = vadd.f32 %v68, %v265
  %267 = vmatmul.bf16.gmra.mxu0 %v126
  %v268 = vpop.f32.mrf.mxu0
  %v269 = vadd.f32 %v68, %v268
  %v270 = vpop.f32.mrf.mxu0
  %v271 = vadd.f32 %v68, %v270
  %272 = vmatmul.bf16.gmra.mxu0 %v129
  %v273 = vpop.f32.mrf.mxu0
  %v274 = vadd.f32 %v68, %v273
  %v275 = vpop.f32.mrf.mxu0
  %276 = vdwg.mxu0
  %v277 = vmax.f32 %v141, 0.0
  %v278 = vmax.f32 %v214, 0.0
  %v279 = vmax.f32 %v143, 0.0
  %v280 = vmax.f32 %v216, 0.0
  %v281 = vmax.f32 %v146, 0.0
  %v282 = vmax.f32 %v219, 0.0
  %v283 = vmax.f32 %v148, 0.0
  %v284 = vmax.f32 %v221, 0.0
  %v285 = vmax.f32 %v151, 0.0
  %v286 = vmax.f32 %v224, 0.0
  %v287 = vmax.f32 %v153, 0.0
  %v288 = vmax.f32 %v226, 0.0
  %v289 = vmax.f32 %v156, 0.0
  %v290 = vmax.f32 %v229, 0.0
  %v291 = vmax.f32 %v158, 0.0
  %v292 = vmax.f32 %v231, 0.0
  %v293 = vmax.f32 %v161, 0.0
  %v294 = vmax.f32 %v234, 0.0
  %v295 = vmax.f32 %v163, 0.0
  %v296 = vmax.f32 %v236, 0.0
  %v297 = vmax.f32 %v166, 0.0
  %v298 = vmax.f32 %v239, 0.0
  %v299 = vmax.f32 %v168, 0.0
  %v300 = vmax.f32 %v241, 0.0
  %v301 = vmax.f32 %v171, 0.0
  %v302 = vmax.f32 %v244, 0.0
  %v303 = vmax.f32 %v173, 0.0
  %v304 = vmax.f32 %v246, 0.0
  %v305 = vmax.f32 %v176, 0.0
  %v306 = vmax.f32 %v249, 0.0
  %v307 = vmax.f32 %v178, 0.0
  %v308 = vmax.f32 %v251, 0.0
  %v309 = vmax.f32 %v181, 0.0
  %v310 = vmax.f32 %v254, 0.0
  %v311 = vmax.f32 %v183, 0.0
  %v312 = vmax.f32 %v256, 0.0
  %v313 = vmax.f32 %v186, 0.0
  %v314 = vmax.f32 %v259, 0.0
  %v315 = vmax.f32 %v188, 0.0
  %v316 = vmax.f32 %v261, 0.0
  %v317 = vmax.f32 %v191, 0.0
  %v318 = vmax.f32 %v264, 0.0
  %v319 = vmax.f32 %v193, 0.0
  %v320 = vmax.f32 %v266, 0.0
  %v321 = vmax.f32 %v196, 0.0
  %v322 = vmax.f32 %v269, 0.0
  %v323 = vmax.f32 %v198, 0.0
  %v324 = vmax.f32 %v271, 0.0
  %v325 = vmax.f32 %v201, 0.0
  %v326 = vmax.f32 %v274, 0.0
  %v327 = vld [vmem:[%s3] sm:$0x3]
  %v329 = vperm.slane %v327, 0
  %v330 = vperm.slane %v327, 1
  %v333 = vmul.f32 %v277, %v329
  %v334 = vmul.f32 %v278, %v330
  %v335 = vmul.f32 %v279, %v329
  %v336 = vmul.f32 %v280, %v330
  %v337 = vmul.f32 %v281, %v329
  %v338 = vmul.f32 %v282, %v330
  %v339 = vmul.f32 %v283, %v329
  %v340 = vmul.f32 %v284, %v330
  %v341 = vmul.f32 %v285, %v329
  %v342 = vmul.f32 %v286, %v330
  %v343 = vmul.f32 %v287, %v329
  %v344 = vmul.f32 %v288, %v330
  %v345 = vmul.f32 %v289, %v329
  %v346 = vmul.f32 %v290, %v330
  %v347 = vmul.f32 %v291, %v329
  %v348 = vmul.f32 %v292, %v330
  %v349 = vmul.f32 %v293, %v329
  %v350 = vmul.f32 %v294, %v330
  %v351 = vmul.f32 %v295, %v329
  %v352 = vmul.f32 %v296, %v330
  %v353 = vmul.f32 %v297, %v329
  %v354 = vmul.f32 %v298, %v330
  %v355 = vmul.f32 %v299, %v329
  %v356 = vmul.f32 %v300, %v330
  %v357 = vmul.f32 %v301, %v329
  %v358 = vmul.f32 %v302, %v330
  %v359 = vmul.f32 %v303, %v329
  %v360 = vmul.f32 %v304, %v330
  %v361 = vmul.f32 %v305, %v329
  %v362 = vmul.f32 %v306, %v330
  %v363 = vmul.f32 %v307, %v329
  %v364 = vmul.f32 %v308, %v330
  %v365 = vmul.f32 %v309, %v329
  %v366 = vmul.f32 %v310, %v330
  %v367 = vmul.f32 %v311, %v329
  %v368 = vmul.f32 %v312, %v330
  %v369 = vmul.f32 %v313, %v329
  %v370 = vmul.f32 %v314, %v330
  %v371 = vmul.f32 %v315, %v329
  %v372 = vmul.f32 %v316, %v330
  %v373 = vmul.f32 %v317, %v329
  %v374 = vmul.f32 %v318, %v330
  %v375 = vmul.f32 %v319, %v329
  %v376 = vmul.f32 %v320, %v330
  %v377 = vmul.f32 %v321, %v329
  %v378 = vmul.f32 %v322, %v330
  %v379 = vmul.f32 %v323, %v329
  %v380 = vmul.f32 %v324, %v330
  %v381 = vmul.f32 %v325, %v329
  %v382 = vmul.f32 %v326, %v330
  %v383 = vadd.f32 %v333, %v334
  %384 = vadd.xlane.f32.xlu0 %v383
  %v385 = vpop.xlane.xlu0 %384
  %v386 = vadd.f32 %v335, %v336
  %387 = vadd.xlane.f32.xlu0 %v386
  %v388 = vpop.xlane.xlu0 %387
  %v389 = vadd.f32 %v337, %v338
  %390 = vadd.xlane.f32.xlu0 %v389
  %v391 = vpop.xlane.xlu0 %390
  %v392 = vadd.f32 %v339, %v340
  %393 = vadd.xlane.f32.xlu0 %v392
  %v394 = vpop.xlane.xlu0 %393
  %v395 = vadd.f32 %v341, %v342
  %396 = vadd.xlane.f32.xlu0 %v395
  %v397 = vpop.xlane.xlu0 %396
  %v398 = vadd.f32 %v343, %v344
  %399 = vadd.xlane.f32.xlu0 %v398
  %v400 = vpop.xlane.xlu0 %399
  %v401 = vadd.f32 %v345, %v346
  %402 = vadd.xlane.f32.xlu0 %v401
  %v403 = vpop.xlane.xlu0 %402
  %v404 = vadd.f32 %v347, %v348
  %405 = vadd.xlane.f32.xlu0 %v404
  %v406 = vpop.xlane.xlu0 %405
  %v407 = vadd.f32 %v349, %v350
  %408 = vadd.xlane.f32.xlu0 %v407
  %v409 = vpop.xlane.xlu0 %408
  %v410 = vadd.f32 %v351, %v352
  %411 = vadd.xlane.f32.xlu0 %v410
  %v412 = vpop.xlane.xlu0 %411
  %v413 = vadd.f32 %v353, %v354
  %414 = vadd.xlane.f32.xlu0 %v413
  %v415 = vpop.xlane.xlu0 %414
  %v416 = vadd.f32 %v355, %v356
  %417 = vadd.xlane.f32.xlu0 %v416
  %v418 = vpop.xlane.xlu0 %417
  %v419 = vadd.f32 %v357, %v358
  %420 = vadd.xlane.f32.xlu0 %v419
  %v421 = vpop.xlane.xlu0 %420
  %v422 = vadd.f32 %v359, %v360
  %423 = vadd.xlane.f32.xlu0 %v422
  %v424 = vpop.xlane.xlu0 %423
  %v425 = vadd.f32 %v361, %v362
  %426 = vadd.xlane.f32.xlu0 %v425
  %v427 = vpop.xlane.xlu0 %426
  %v428 = vadd.f32 %v363, %v364
  %429 = vadd.xlane.f32.xlu0 %v428
  %v430 = vpop.xlane.xlu0 %429
  %v431 = vadd.f32 %v365, %v366
  %432 = vadd.xlane.f32.xlu0 %v431
  %v433 = vpop.xlane.xlu0 %432
  %v434 = vadd.f32 %v367, %v368
  %435 = vadd.xlane.f32.xlu0 %v434
  %v436 = vpop.xlane.xlu0 %435
  %v437 = vadd.f32 %v369, %v370
  %438 = vadd.xlane.f32.xlu0 %v437
  %v439 = vpop.xlane.xlu0 %438
  %v440 = vadd.f32 %v371, %v372
  %441 = vadd.xlane.f32.xlu0 %v440
  %v442 = vpop.xlane.xlu0 %441
  %v443 = vadd.f32 %v373, %v374
  %444 = vadd.xlane.f32.xlu0 %v443
  %v445 = vpop.xlane.xlu0 %444
  %v446 = vadd.f32 %v375, %v376
  %447 = vadd.xlane.f32.xlu0 %v446
  %v448 = vpop.xlane.xlu0 %447
  %v449 = vadd.f32 %v377, %v378
  %450 = vadd.xlane.f32.xlu0 %v449
  %v451 = vpop.xlane.xlu0 %450
  %v452 = vadd.f32 %v379, %v380
  %453 = vadd.xlane.f32.xlu0 %v452
  %v454 = vpop.xlane.xlu0 %453
  %v455 = vadd.f32 %v381, %v382
  %456 = vadd.xlane.f32.xlu0 %v455
  %v457 = vpop.xlane.xlu0 %456
  %v458 = vld [vmem:[#allocation2] sm:$0x1]
  %v460 = vperm.slane %v458, 0
  %v462 = vadd.f32 %v385, %v460
  %v463 = vadd.f32 %v388, %v460
  %v464 = vadd.f32 %v391, %v460
  %v465 = vadd.f32 %v394, %v460
  %v466 = vadd.f32 %v397, %v460
  %v467 = vadd.f32 %v400, %v460
  %v468 = vadd.f32 %v403, %v460
  %v469 = vadd.f32 %v406, %v460
  %v470 = vadd.f32 %v409, %v460
  %v471 = vadd.f32 %v412, %v460
  %v472 = vadd.f32 %v415, %v460
  %v473 = vadd.f32 %v418, %v460
  %v474 = vadd.f32 %v421, %v460
  %v475 = vadd.f32 %v424, %v460
  %v476 = vadd.f32 %v427, %v460
  %v477 = vadd.f32 %v430, %v460
  %v478 = vadd.f32 %v433, %v460
  %v479 = vadd.f32 %v436, %v460
  %v480 = vadd.f32 %v439, %v460
  %v481 = vadd.f32 %v442, %v460
  %v482 = vadd.f32 %v445, %v460
  %v483 = vadd.f32 %v448, %v460
  %v484 = vadd.f32 %v451, %v460
  %v485 = vadd.f32 %v454, %v460
  %v486 = vadd.f32 %v457, %v460
  %vm487 = vcmask 7168
  %488 = vst.msk [vmem:[%s5] sm:$0xff] %vm487, %v462
  %489 = vst.msk [vmem:[%s5 + $0x8] sm:$0xff] %vm487, %v463
  %490 = vst.msk [vmem:[%s5 + $0x10] sm:$0xff] %vm487, %v464
  %491 = vst.msk [vmem:[%s5 + $0x18] sm:$0xff] %vm487, %v465
  %492 = vst.msk [vmem:[%s5 + $0x20] sm:$0xff] %vm487, %v466
  %493 = vst.msk [vmem:[%s5 + $0x28] sm:$0xff] %vm487, %v467
  %494 = vst.msk [vmem:[%s5 + $0x30] sm:$0xff] %vm487, %v468
  %495 = vst.msk [vmem:[%s5 + $0x38] sm:$0xff] %vm487, %v469
  %496 = vst.msk [vmem:[%s5 + $0x40] sm:$0xff] %vm487, %v470
  %497 = vst.msk [vmem:[%s5 + $0x48] sm:$0xff] %vm487, %v471
  %498 = vst.msk [vmem:[%s5 + $0x50] sm:$0xff] %vm487, %v472
  %499 = vst.msk [vmem:[%s5 + $0x58] sm:$0xff] %vm487, %v473
  %500 = vst.msk [vmem:[%s5 + $0x60] sm:$0xff] %vm487, %v474
  %501 = vst.msk [vmem:[%s5 + $0x68] sm:$0xff] %vm487, %v475
  %502 = vst.msk [vmem:[%s5 + $0x70] sm:$0xff] %vm487, %v476
  %503 = vst.msk [vmem:[%s5 + $0x78] sm:$0xff] %vm487, %v477
  %504 = vst.msk [vmem:[%s5 + $0x80] sm:$0xff] %vm487, %v478
  %505 = vst.msk [vmem:[%s5 + $0x88] sm:$0xff] %vm487, %v479
  %506 = vst.msk [vmem:[%s5 + $0x90] sm:$0xff] %vm487, %v480
  %507 = vst.msk [vmem:[%s5 + $0x98] sm:$0xff] %vm487, %v481
  %508 = vst.msk [vmem:[%s5 + $0xa0] sm:$0xff] %vm487, %v482
  %509 = vst.msk [vmem:[%s5 + $0xa8] sm:$0xff] %vm487, %v483
  %510 = vst.msk [vmem:[%s5 + $0xb0] sm:$0xff] %vm487, %v484
  %511 = vst.msk [vmem:[%s5 + $0xb8] sm:$0xff] %vm487, %v485
  %512 = vst.msk [vmem:[%s5 + $0xc0] sm:$0xff] %vm487, %v486
  // Predicated region
  $region22: #{tpu_custom_call.1} parent=0 // pred_check
    _
  $region23: #{tpu_custom_call.1} parent=0 // pred_check_branch
    %514 = sbr.rel (0) target = $region25
  $region24: #{tpu_custom_call.1} parent=0 // pred_region
    _
  $region25: #{tpu_custom_call.1} parent=0 // pred_fallthru
    _
  // Predicated region
  $region26: #{tpu_custom_call.1} parent=0 // pred_check
    _
  $region27: #{tpu_custom_call.1} parent=0 // pred_check_branch
    %516 = sbr.rel (0) target = $region29
  $region28: #{tpu_custom_call.1} parent=0 // pred_region
    _
  $region29: #{tpu_custom_call.1} parent=0 // pred_fallthru
    _

</llo_original>
